<compile_context>
chip_gen: v7x
topology: tpu7x:2x2x1
jax: 0.10.0
libtpu: 0.0.40
codegen_flags: <defaults>
</compile_context>

<pallas_src>
import functools
import math

import jax
import jax.numpy as jnp
from jax import lax
from jax.experimental import pallas as pl
from jax.experimental.pallas import tpu as pltpu

WINDOW_SIZE = 11


# ---------------------------------------------------------------------------
# Deterministic window construction (mirrors gaussian()/create_window())
# ---------------------------------------------------------------------------
def _gaussian(window_size, sigma):
    g = jnp.array(
        [math.exp(-((x - window_size // 2) ** 2) / float(2 * sigma ** 2))
         for x in range(window_size)],
        dtype=jnp.float32,
    )
    return g / jnp.sum(g)


def create_window_2d(window_size):
    g1 = _gaussian(window_size, 1.5)[:, None]            # (ws, 1)
    return (g1 @ g1.T).astype(jnp.float32)               # (ws, ws)


def _band_matrices(H, W, WS):
    """A_v (OH,H) and A_h (W,OW) such that A_v @ P @ A_h == valid corr(P, g⊗g)."""
    g = _gaussian(WS, 1.5)                                # (WS,)
    OH, OW = H - WS + 1, W - WS + 1
    # A_v[r, h] = g[h - r]  for h in [r, r+WS)
    kv = jnp.arange(H)[None, :] - jnp.arange(OH)[:, None]
    av = jnp.where((kv >= 0) & (kv < WS), g[jnp.clip(kv, 0, WS - 1)], 0.0)
    # A_h[w, c] = g[w - c]  for w in [c, c+WS)
    kh = jnp.arange(W)[:, None] - jnp.arange(OW)[None, :]
    ah = jnp.where((kh >= 0) & (kh < WS), g[jnp.clip(kh, 0, WS - 1)], 0.0)
    return av.astype(jnp.float32), ah.astype(jnp.float32)


# ---------------------------------------------------------------------------
# Pallas kernel: one (batch, channel) plane per grid step
# ---------------------------------------------------------------------------
def _ssim_kernel(consts_ref, av_ref, ah_ref, x_ref, y_ref, out_ref):
    C1 = consts_ref[0]
    C2 = consts_ref[1]

    av = av_ref[...]                         # (OH, H)  resident in VMEM
    ah = ah_ref[...]                         # (W, OW)  resident in VMEM
    x = x_ref[0].astype(jnp.float32)         # (H, W)
    y = y_ref[0].astype(jnp.float32)         # (H, W)

    # Product hoist: compute once, reuse for the convolutions.
    xx = x * x
    yy = y * y
    xy = x * y

    def gconv(p):                            # separable Gaussian conv on MXU
        t = jnp.dot(av, p, preferred_element_type=jnp.float32)    # (OH, W)
        return jnp.dot(t, ah, preferred_element_type=jnp.float32)  # (OH, OW)

    mu1 = gconv(x)
    mu2 = gconv(y)
    s11 = gconv(xx)
    s22 = gconv(yy)
    s12 = gconv(xy)

    mu1_sq = mu1 * mu1
    mu2_sq = mu2 * mu2
    mu1_mu2 = mu1 * mu2
    sigma1_sq = s11 - mu1_sq
    sigma2_sq = s22 - mu2_sq
    sigma12 = s12 - mu1_mu2

    v1 = 2.0 * sigma12 + C2
    v2 = sigma1_sq + sigma2_sq + C2
    num = (2.0 * mu1_mu2 + C1) * v1
    den = (mu1_sq + mu2_sq + C1) * v2

    # Approx reciprocal on the EUP + one Newton refinement (~1e-7 rel error).
    r = pl.reciprocal(den, approx=True)
    r = r * (2.0 - den * r)
    ssim_map = num * r

    # Per-plane partial sum, written as one lane-dense (8,128) tile so the
    # grid axis can stay "parallel" (no cross-iteration accumulator).
    partial = jnp.sum(ssim_map)
    row = lax.broadcasted_iota(jnp.int32, (8, 128), 0)
    lane = lax.broadcasted_iota(jnp.int32, (8, 128), 1)
    out_ref[0] = jnp.where((row == 0) & (lane == 0), partial, 0.0)


# ---------------------------------------------------------------------------
# Wrapper (glue): value range, band matrices, pallas_call, final mean
# ---------------------------------------------------------------------------
def ssim_pallas(img1, img2, window_size=WINDOW_SIZE, size_average=True,
                val_range=None):
    assert size_average, "only size_average=True implemented (module default)"
    B, C, H, W = img1.shape
    WS = window_size
    assert H >= WS and W >= WS, "image smaller than window is unsupported"

    if val_range is None:
        max_val = jnp.where(jnp.max(img1) > 128, 255.0, 1.0)
        min_val = jnp.where(jnp.min(img1) < -0.5, -1.0, 0.0)
        L = max_val - min_val
    else:
        L = jnp.float32(val_range)
    C1 = (0.01 * L) ** 2
    C2 = (0.03 * L) ** 2
    consts = jnp.stack([C1, C2]).astype(jnp.float32)          # (2,) in SMEM

    av, ah = _band_matrices(H, W, WS)                          # (OH,H), (W,OW)
    OH, OW = H - WS + 1, W - WS + 1

    x = img1.reshape(B * C, H, W)
    y = img2.reshape(B * C, H, W)
    BC = B * C

    partials = pl.pallas_call(
        _ssim_kernel,
        out_shape=jax.ShapeDtypeStruct((BC, 8, 128), jnp.float32),
        grid=(BC,),
        in_specs=[
            pl.BlockSpec(memory_space=pltpu.MemorySpace.SMEM),   # C1, C2
            pl.BlockSpec((OH, H), lambda g: (0, 0)),             # A_v (VMEM)
            pl.BlockSpec((W, OW), lambda g: (0, 0)),             # A_h (VMEM)
            pl.BlockSpec((1, H, W), lambda g: (g, 0, 0)),        # img1 plane
            pl.BlockSpec((1, H, W), lambda g: (g, 0, 0)),        # img2 plane
        ],
        out_specs=pl.BlockSpec((1, 8, 128), lambda g: (g, 0, 0)),
        compiler_params=pltpu.CompilerParams(
            dimension_semantics=("parallel",)),
    )(consts, av, ah, x, y)

    return jnp.sum(partials) / jnp.float32(BC * OH * OW)


class SSIM:
    """Thin stand-in for the torch SSIM module (size_average=True)."""

    def __init__(self, window_size=WINDOW_SIZE, size_average=True,
                 val_range=None):
        self.window_size = window_size
        self.size_average = size_average
        self.val_range = val_range

    def __call__(self, img1, img2):
        return ssim_pallas(img1, img2, window_size=self.window_size,
                           size_average=self.size_average,
                           val_range=self.val_range)


# ---------------------------------------------------------------------------
# Pure-JAX reference (for correctness check against the kernel)
# ---------------------------------------------------------------------------
def ssim_ref(img1, img2, window_size=WINDOW_SIZE):
    B, C, H, W = img1.shape
    w2 = create_window_2d(window_size)
    win = jnp.broadcast_to(w2[None, None], (C, 1, window_size, window_size))

    def conv(z):
        return lax.conv_general_dilated(
            z, win, (1, 1), "VALID", feature_group_count=C,
            dimension_numbers=("NCHW", "OIHW", "NCHW"))

    max_val = jnp.where(jnp.max(img1) > 128, 255.0, 1.0)
    min_val = jnp.where(jnp.min(img1) < -0.5, -1.0, 0.0)
    L = max_val - min_val
    C1 = (0.01 * L) ** 2
    C2 = (0.03 * L) ** 2

    mu1, mu2 = conv(img1), conv(img2)
    mu1_sq, mu2_sq, mu1_mu2 = mu1 * mu1, mu2 * mu2, mu1 * mu2
    sigma1_sq = conv(img1 * img1) - mu1_sq
    sigma2_sq = conv(img2 * img2) - mu2_sq
    sigma12 = conv(img1 * img2) - mu1_mu2
    v1 = 2.0 * sigma12 + C2
    v2 = sigma1_sq + sigma2_sq + C2
    ssim_map = (2 * mu1_mu2 + C1) * v1 / ((mu1_sq + mu2_sq + C1) * v2)
    return jnp.mean(ssim_map)


if __name__ == "__main__":
    key = jax.random.PRNGKey(0)
    k1, k2 = jax.random.split(key)
    B, C, H, W = 2, 4, 16, 16
    img1 = jax.random.uniform(k1, (B, C, H, W), dtype=jnp.float32)
    img2 = jax.random.uniform(k2, (B, C, H, W), dtype=jnp.float32)

    model = SSIM(window_size=WINDOW_SIZE, size_average=True)
    out = model(img1, img2)
    out = jax.block_until_ready(out)

    ref = jax.block_until_ready(ssim_ref(img1, img2))
    assert jnp.abs(out - ref) < 1e-4, (out, ref)

    print("KERNEL_OK")
</pallas_src>

<mosaic_0001>
module attributes {stable_mosaic.version = 11 : i64} {
  func.func @_ssim_kernel(%arg0: i32, %arg1: memref<2xf32, #tpu.memory_space<smem>>, %arg2: memref<6x16xf32, #tpu.memory_space<vmem>>, %arg3: memref<16x6xf32, #tpu.memory_space<vmem>>, %arg4: memref<1x16x16xf32, #tpu.memory_space<vmem>>, %arg5: memref<1x16x16xf32, #tpu.memory_space<vmem>>, %arg6: memref<1x8x128xf32, #tpu.memory_space<vmem>>) attributes {dimension_semantics = [#tpu.dimension_semantics<parallel>], iteration_bounds = array<i64: 8>, scalar_prefetch = 0 : i64, scratch_operands = 0 : i64, tpu.core_type = #tpu.core_type<tc>, window_params = [{transform_indices = @transform_0, window_bounds = array<i64: 2>}, {pipeline_mode = #tpu.pipeline_mode<synchronous>, transform_indices = @transform_1, window_bounds = array<i64: 6, 16>}, {pipeline_mode = #tpu.pipeline_mode<synchronous>, transform_indices = @transform_2, window_bounds = array<i64: 16, 6>}, {transform_indices = @transform_3, window_bounds = array<i64: 1, 16, 16>}, {transform_indices = @transform_4, window_bounds = array<i64: 1, 16, 16>}, {transform_indices = @transform_5, window_bounds = array<i64: 1, 8, 128>}]} {
    %c0 = arith.constant 0 : index
    %0 = memref.load %arg1[%c0] : memref<2xf32, #tpu.memory_space<smem>>
    %c1 = arith.constant 1 : index
    %1 = memref.load %arg1[%c1] : memref<2xf32, #tpu.memory_space<smem>>
    %c0_0 = arith.constant 0 : index
    %c0_1 = arith.constant 0 : index
    %2 = vector.load %arg2[%c0_0, %c0_1] : memref<6x16xf32, #tpu.memory_space<vmem>>, vector<6x16xf32>
    %c0_2 = arith.constant 0 : index
    %c0_3 = arith.constant 0 : index
    %3 = vector.load %arg3[%c0_2, %c0_3] : memref<16x6xf32, #tpu.memory_space<vmem>>, vector<16x6xf32>
    %c0_4 = arith.constant 0 : index
    %c0_5 = arith.constant 0 : index
    %c0_6 = arith.constant 0 : index
    %4 = vector.load %arg4[%c0_4, %c0_5, %c0_6] : memref<1x16x16xf32, #tpu.memory_space<vmem>>, vector<1x16x16xf32>
    %5 = vector.shape_cast %4 : vector<1x16x16xf32> to vector<16x16xf32>
    %c0_7 = arith.constant 0 : index
    %c0_8 = arith.constant 0 : index
    %c0_9 = arith.constant 0 : index
    %6 = vector.load %arg5[%c0_7, %c0_8, %c0_9] : memref<1x16x16xf32, #tpu.memory_space<vmem>>, vector<1x16x16xf32>
    %7 = vector.shape_cast %6 : vector<1x16x16xf32> to vector<16x16xf32>
    %8 = arith.mulf %5, %5 : vector<16x16xf32>
    %9 = arith.mulf %7, %7 : vector<16x16xf32>
    %10 = arith.mulf %5, %7 : vector<16x16xf32>
    %cst = arith.constant dense<0.000000e+00> : vector<6x16xf32>
    %11 = tpu.matmul %2, %5, %cst {dimension_numbers = #tpu.dot_dimension_numbers<[1], [0], [0], [1], [0, 0, 1, 1], [], []>} : vector<6x16xf32>, vector<16x16xf32>, vector<6x16xf32> -> vector<6x16xf32>
    %cst_10 = arith.constant dense<0.000000e+00> : vector<6x6xf32>
    %12 = tpu.matmul %11, %3, %cst_10 {dimension_numbers = #tpu.dot_dimension_numbers<[1], [0], [0], [1], [0, 0, 1, 1], [], []>} : vector<6x16xf32>, vector<16x6xf32>, vector<6x6xf32> -> vector<6x6xf32>
    %cst_11 = arith.constant dense<0.000000e+00> : vector<6x16xf32>
    %13 = tpu.matmul %2, %7, %cst_11 {dimension_numbers = #tpu.dot_dimension_numbers<[1], [0], [0], [1], [0, 0, 1, 1], [], []>} : vector<6x16xf32>, vector<16x16xf32>, vector<6x16xf32> -> vector<6x16xf32>
    %cst_12 = arith.constant dense<0.000000e+00> : vector<6x6xf32>
    %14 = tpu.matmul %13, %3, %cst_12 {dimension_numbers = #tpu.dot_dimension_numbers<[1], [0], [0], [1], [0, 0, 1, 1], [], []>} : vector<6x16xf32>, vector<16x6xf32>, vector<6x6xf32> -> vector<6x6xf32>
    %cst_13 = arith.constant dense<0.000000e+00> : vector<6x16xf32>
    %15 = tpu.matmul %2, %8, %cst_13 {dimension_numbers = #tpu.dot_dimension_numbers<[1], [0], [0], [1], [0, 0, 1, 1], [], []>} : vector<6x16xf32>, vector<16x16xf32>, vector<6x16xf32> -> vector<6x16xf32>
    %cst_14 = arith.constant dense<0.000000e+00> : vector<6x6xf32>
    %16 = tpu.matmul %15, %3, %cst_14 {dimension_numbers = #tpu.dot_dimension_numbers<[1], [0], [0], [1], [0, 0, 1, 1], [], []>} : vector<6x16xf32>, vector<16x6xf32>, vector<6x6xf32> -> vector<6x6xf32>
    %cst_15 = arith.constant dense<0.000000e+00> : vector<6x16xf32>
    %17 = tpu.matmul %2, %9, %cst_15 {dimension_numbers = #tpu.dot_dimension_numbers<[1], [0], [0], [1], [0, 0, 1, 1], [], []>} : vector<6x16xf32>, vector<16x16xf32>, vector<6x16xf32> -> vector<6x16xf32>
    %cst_16 = arith.constant dense<0.000000e+00> : vector<6x6xf32>
    %18 = tpu.matmul %17, %3, %cst_16 {dimension_numbers = #tpu.dot_dimension_numbers<[1], [0], [0], [1], [0, 0, 1, 1], [], []>} : vector<6x16xf32>, vector<16x6xf32>, vector<6x6xf32> -> vector<6x6xf32>
    %cst_17 = arith.constant dense<0.000000e+00> : vector<6x16xf32>
    %19 = tpu.matmul %2, %10, %cst_17 {dimension_numbers = #tpu.dot_dimension_numbers<[1], [0], [0], [1], [0, 0, 1, 1], [], []>} : vector<6x16xf32>, vector<16x16xf32>, vector<6x16xf32> -> vector<6x16xf32>
    %cst_18 = arith.constant dense<0.000000e+00> : vector<6x6xf32>
    %20 = tpu.matmul %19, %3, %cst_18 {dimension_numbers = #tpu.dot_dimension_numbers<[1], [0], [0], [1], [0, 0, 1, 1], [], []>} : vector<6x16xf32>, vector<16x6xf32>, vector<6x6xf32> -> vector<6x6xf32>
    %21 = arith.mulf %12, %12 : vector<6x6xf32>
    %22 = arith.mulf %14, %14 : vector<6x6xf32>
    %23 = arith.mulf %12, %14 : vector<6x6xf32>
    %24 = arith.subf %16, %21 : vector<6x6xf32>
    %25 = arith.subf %18, %22 : vector<6x6xf32>
    %26 = arith.subf %20, %23 : vector<6x6xf32>
    %cst_19 = arith.constant 2.000000e+00 : f32
    %27 = vector.broadcast %cst_19 : f32 to vector<6x6xf32>
    %28 = arith.mulf %27, %26 : vector<6x6xf32>
    %29 = vector.broadcast %1 : f32 to vector<6x6xf32>
    %30 = arith.addf %28, %29 : vector<6x6xf32>
    %31 = arith.addf %24, %25 : vector<6x6xf32>
    %32 = vector.broadcast %1 : f32 to vector<6x6xf32>
    %33 = arith.addf %31, %32 : vector<6x6xf32>
    %cst_20 = arith.constant 2.000000e+00 : f32
    %34 = vector.broadcast %cst_20 : f32 to vector<6x6xf32>
    %35 = arith.mulf %34, %23 : vector<6x6xf32>
    %36 = vector.broadcast %0 : f32 to vector<6x6xf32>
    %37 = arith.addf %35, %36 : vector<6x6xf32>
    %38 = arith.mulf %37, %30 : vector<6x6xf32>
    %39 = arith.addf %21, %22 : vector<6x6xf32>
    %40 = vector.broadcast %0 : f32 to vector<6x6xf32>
    %41 = arith.addf %39, %40 : vector<6x6xf32>
    %42 = arith.mulf %41, %33 : vector<6x6xf32>
    %43 = tpu.reciprocal %42 {approx = true} : vector<6x6xf32> -> vector<6x6xf32>
    %44 = arith.mulf %42, %43 : vector<6x6xf32>
    %cst_21 = arith.constant 2.000000e+00 : f32
    %45 = vector.broadcast %cst_21 : f32 to vector<6x6xf32>
    %46 = arith.subf %45, %44 : vector<6x6xf32>
    %47 = arith.mulf %43, %46 : vector<6x6xf32>
    %48 = arith.mulf %38, %47 : vector<6x6xf32>
    %49 = vector.shape_cast %48 : vector<6x6xf32> to vector<1x6x6xf32>
    %cst_22 = arith.constant dense<0.000000e+00> : vector<1xf32>
    %50 = vector.multi_reduction <add>, %49, %cst_22 [1, 2] : vector<1x6x6xf32> to vector<1xf32>
    %51 = vector.shape_cast %50 : vector<1xf32> to vector<1x1x1xf32>
    %52 = vector.extract %51[0, 0, 0] : f32 from vector<1x1x1xf32>
    %53 = tpu.iota {dimensions = array<i32: 0>} : vector<8x128xi32>
    %54 = tpu.iota {dimensions = array<i32: 1>} : vector<8x128xi32>
    %c0_i32 = arith.constant 0 : i32
    %55 = vector.broadcast %c0_i32 : i32 to vector<8x128xi32>
    %56 = arith.cmpi eq, %53, %55 : vector<8x128xi32>
    %c0_i32_23 = arith.constant 0 : i32
    %57 = vector.broadcast %c0_i32_23 : i32 to vector<8x128xi32>
    %58 = arith.cmpi eq, %54, %57 : vector<8x128xi32>
    %59 = arith.andi %56, %58 : vector<8x128xi1>
    %cst_24 = arith.constant 0.000000e+00 : f32
    %60 = vector.broadcast %52 : f32 to vector<8x128xf32>
    %61 = vector.broadcast %cst_24 : f32 to vector<8x128xf32>
    %62 = arith.select %59, %60, %61 : vector<8x128xi1>, vector<8x128xf32>
    %c0_25 = arith.constant 0 : index
    %c0_26 = arith.constant 0 : index
    %c0_27 = arith.constant 0 : index
    %63 = vector.load %arg6[%c0_25, %c0_26, %c0_27] : memref<1x8x128xf32, #tpu.memory_space<vmem>>, vector<1x8x128xf32>
    %64 = vector.shape_cast %63 : vector<1x8x128xf32> to vector<8x128xf32>
    %65 = vector.shape_cast %62 : vector<8x128xf32> to vector<1x8x128xf32>
    tpu.vector_store %arg6[%c0_25, %c0_26, %c0_27], %65 {strides = array<i32>} : memref<1x8x128xf32, #tpu.memory_space<vmem>>, vector<1x8x128xf32>,
    return
  }
  func.func @transform_0(%arg0: i32) -> i32 {
    %c0_i32 = arith.constant 0 : i32
    %c0_i32_0 = arith.constant 0 : i32
    return %c0_i32 : i32
  }
  func.func @transform_1(%arg0: i32) -> (i32, i32) {
    %c0_i32 = arith.constant 0 : i32
    %c0_i32_0 = arith.constant 0 : i32
    %c0_i32_1 = arith.constant 0 : i32
    return %c0_i32, %c0_i32_0 : i32, i32
  }
  func.func @transform_2(%arg0: i32) -> (i32, i32) {
    %c0_i32 = arith.constant 0 : i32
    %c0_i32_0 = arith.constant 0 : i32
    %c0_i32_1 = arith.constant 0 : i32
    return %c0_i32, %c0_i32_0 : i32, i32
  }
  func.func @transform_3(%arg0: i32) -> (i32, i32, i32) {
    %c0_i32 = arith.constant 0 : i32
    %c0_i32_0 = arith.constant 0 : i32
    %c0_i32_1 = arith.constant 0 : i32
    return %arg0, %c0_i32, %c0_i32_0 : i32, i32, i32
  }
  func.func @transform_4(%arg0: i32) -> (i32, i32, i32) {
    %c0_i32 = arith.constant 0 : i32
    %c0_i32_0 = arith.constant 0 : i32
    %c0_i32_1 = arith.constant 0 : i32
    return %arg0, %c0_i32, %c0_i32_0 : i32, i32, i32
  }
  func.func @transform_5(%arg0: i32) -> (i32, i32, i32) {
    %c0_i32 = arith.constant 0 : i32
    %c0_i32_0 = arith.constant 0 : i32
    %c0_i32_1 = arith.constant 0 : i32
    return %arg0, %c0_i32, %c0_i32_0 : i32, i32, i32
  }
}

</mosaic_0001>

<llo_original>
// kernel: tpu_custom_call.1
$region0: #{tpu_custom_call.1}
  #allocation0 [shape = 'u32[]', space=smem, size = 0x4, offset = 0x4, fixed_abs, tag = 'smem constant byte address 0x4 - core index']
  #allocation1 [shape = 'u32[144,128]{1,0:T(1,128)}', space=vmem, size = 0x12000, scoped, tag = 'internal scratch']
  %s0 = inlined_call_operand.vmem [shape: f32[2], index: 0, kind: input, shape index: {}]
  %s1 = inlined_call_operand.vmem [shape: f32[6,16], index: 1, kind: input, shape index: {}]
  %s2 = inlined_call_operand.vmem [shape: f32[16,6], index: 2, kind: input, shape index: {}]
  %s3 = inlined_call_operand.hbm [shape: f32[8,16,16], index: 3, kind: input, shape index: {}]
  %s4 = inlined_call_operand.hbm [shape: f32[8,16,16], index: 4, kind: input, shape index: {}]
  %s5 = inlined_call_operand.hbm [shape: f32[8,8,128], index: 5, kind: output, shape index: {}]
  %s6 = sld [smem:[#allocation0]]
  $region65: #{tpu_custom_call.1} parent=0
    _
  %s8 = ssub.s32 1, %s6
  %s9 = scalar_select 0, %s8, %s6
  $region1: #{tpu_custom_call.1} parent=0
    #allocation2 [shape = 'u8[512]{0}', space=smem, size = 0x200, scoped, tag = 'input window, operand 0, single buffered']
    #allocation3 [shape = 's32[2]{0}', space=sflag, size = 0x8, scoped, tag = 'scoped memory for tpu_custom_call.1']
    #allocation4 [shape = 's32[2]{0}', space=sflag, size = 0x8, scoped, tag = 'scoped memory for tpu_custom_call.1']
    #allocation5 [shape = 's32[2]{0}', space=sflag, size = 0x8, scoped, tag = 'scoped memory for tpu_custom_call.1']
    #allocation6 [shape = 'u8[16384]{0}', space=vmem, size = 0x4000, scoped, tag = 'input window, operand 3']
    #allocation7 [shape = 'u8[16384]{0}', space=vmem, size = 0x4000, scoped, tag = 'input window, operand 4']
    #allocation8 [shape = 's32[2]{0}', space=sflag, size = 0x8, scoped, tag = 'scoped memory for tpu_custom_call.1']
    #allocation9 [shape = 'u8[8192]{0}', space=vmem, size = 0x2000, scoped, tag = 'output window, operand 0']
    %10 = vsyncpa [#allocation5], 0
    %11 = vsyncpa [#allocation3], 0
    %s12 = scalar_lea.sflag [#allocation3], 1
    %13 = vsyncpa %s12, 0
    %14 = vsyncpa [#allocation8], 0
    %s15 = scalar_lea.sflag [#allocation8], 1
    %16 = vsyncpa %s15, 0
    %17 = vsyncpa [#allocation4], 0
    %s18 = scalar_lea.sflag [#allocation4], 1
    %19 = vsyncpa %s18, 0
    loop: start=0, step=1, limit=10
    $region2: #{tpu_custom_call.1} parent=1 // loop_pre_header
      _
    $region3: #{tpu_custom_call.1} parent=1 // loop_header
      %s21 = sphi 0, %s25
      %p22 = scmp.ge.s32.totalorder %s21, 10
      %s29 = sphi 0, %s29
      %s31 = sphi 0, %s29
      %s32 = sphi 0, %s31
      %s46 = sphi 0, %s32
      %s50 = sphi 0, %s50
      %s52 = sphi 0, %s50
      %s53 = sphi 0, %s52
      %s67 = sphi 0, %s53
      %s71 = sphi 0, %s71
      %s73 = sphi 0, %s71
      %s74 = sphi 0, %s73
      %s88 = sphi 0, %s74
      %s94 = sphi 0, %s96
      %s97 = sphi 0, %s94
      %s98 = sphi 0, %s97
      %s114 = sphi 0, %s98
      %s120 = sphi 0, %s122
      %s123 = sphi 0, %s120
      %s124 = sphi 0, %s123
      %s140 = sphi 0, %s124
      %s146 = sphi 0, %s148
      %s149 = sphi 0, %s146
      %s150 = sphi 0, %s149
      %s166 = sphi 0, %s150
    $region4: #{tpu_custom_call.1} parent=1 // loop_header_branch
      %24 = sbr.rel (%p22) target = $region8
    $region5: #{tpu_custom_call.1} parent=1 // loop_body
      %s26 = ssub.s32 %s21, 1
      %s27 = ssub.s32 %s21, 2
      %s28 = sadd.s32 %s21, 1
      %s30 = sadd.s32 %s29, 1
      %p33 = scmp.eq.s32.totalorder %s21, 7
      %p34 = scmp.ne.s32.totalorder %s29, %s31
      %p35 = scmp.eq.s32.totalorder %s21, 0
      %p36 = por %p34, %p35
      %p37 = scmp.ne.s32.totalorder %s29, %s31
      %p38 = scmp.eq.s32.totalorder %s26, 7
      %p39 = por %p37, %p38
      %p40 = scmp.ne.s32.totalorder %s31, %s32
      %p41 = scmp.eq.s32.totalorder %s26, 0
      %p42 = por %p40, %p41
      %p43 = scmp.ne.s32.totalorder %s31, %s32
      %p44 = scmp.eq.s32.totalorder %s27, 7
      %p45 = por %p43, %p44
      %p47 = scmp.ne.s32.totalorder %s32, %s46
      %p48 = scmp.eq.s32.totalorder %s27, 0
      %p49 = por %p47, %p48
      %s51 = sadd.s32 %s50, 1
      %p54 = scmp.eq.s32.totalorder %s21, 7
      %p55 = scmp.ne.s32.totalorder %s50, %s52
      %p56 = scmp.eq.s32.totalorder %s21, 0
      %p57 = por %p55, %p56
      %p58 = scmp.ne.s32.totalorder %s50, %s52
      %p59 = scmp.eq.s32.totalorder %s26, 7
      %p60 = por %p58, %p59
      %p61 = scmp.ne.s32.totalorder %s52, %s53
      %p62 = scmp.eq.s32.totalorder %s26, 0
      %p63 = por %p61, %p62
      %p64 = scmp.ne.s32.totalorder %s52, %s53
      %p65 = scmp.eq.s32.totalorder %s27, 7
      %p66 = por %p64, %p65
      %p68 = scmp.ne.s32.totalorder %s53, %s67
      %p69 = scmp.eq.s32.totalorder %s27, 0
      %p70 = por %p68, %p69
      %s72 = sadd.s32 %s71, 1
      %p75 = scmp.eq.s32.totalorder %s21, 7
      %p76 = scmp.ne.s32.totalorder %s71, %s73
      %p77 = scmp.eq.s32.totalorder %s21, 0
      %p78 = por %p76, %p77
      %p79 = scmp.ne.s32.totalorder %s71, %s73
      %p80 = scmp.eq.s32.totalorder %s26, 7
      %p81 = por %p79, %p80
      %p82 = scmp.ne.s32.totalorder %s73, %s74
      %p83 = scmp.eq.s32.totalorder %s26, 0
      %p84 = por %p82, %p83
      %p85 = scmp.ne.s32.totalorder %s73, %s74
      %p86 = scmp.eq.s32.totalorder %s27, 7
      %p87 = por %p85, %p86
      %p89 = scmp.ne.s32.totalorder %s74, %s88
      %p90 = scmp.eq.s32.totalorder %s27, 0
      %p91 = por %p89, %p90
      %s92 = ssub.s32 %s21, %s28
      %p93 = scmp.eq.s32.totalorder %s92, 0
      %s95 = sadd.s32 %s94, 1
      %s96 = scalar_select %p93, %s94, %s95
      %p99 = pneg %p93
      %p100 = scmp.eq.s32.totalorder %s21, 7
      %p101 = por %p99, %p100
      %p102 = scmp.ne.s32.totalorder %s94, %s97
      %p103 = scmp.eq.s32.totalorder %s21, 0
      %p104 = por %p102, %p103
      %p105 = scmp.ne.s32.totalorder %s94, %s97
      %p106 = scmp.eq.s32.totalorder %s26, 7
      %p107 = por %p105, %p106
      %p108 = scmp.ne.s32.totalorder %s97, %s98
      %p109 = scmp.eq.s32.totalorder %s26, 0
      %p110 = por %p108, %p109
      %p111 = scmp.ne.s32.totalorder %s97, %s98
      %p112 = scmp.eq.s32.totalorder %s27, 7
      %p113 = por %p111, %p112
      %p115 = scmp.ne.s32.totalorder %s98, %s114
      %p116 = scmp.eq.s32.totalorder %s27, 0
      %p117 = por %p115, %p116
      %s118 = ssub.s32 %s21, %s28
      %p119 = scmp.eq.s32.totalorder %s118, 0
      %s121 = sadd.s32 %s120, 1
      %s122 = scalar_select %p119, %s120, %s121
      %p125 = pneg %p119
      %p126 = scmp.eq.s32.totalorder %s21, 7
      %p127 = por %p125, %p126
      %p128 = scmp.ne.s32.totalorder %s120, %s123
      %p129 = scmp.eq.s32.totalorder %s21, 0
      %p130 = por %p128, %p129
      %p131 = scmp.ne.s32.totalorder %s120, %s123
      %p132 = scmp.eq.s32.totalorder %s26, 7
      %p133 = por %p131, %p132
      %p134 = scmp.ne.s32.totalorder %s123, %s124
      %p135 = scmp.eq.s32.totalorder %s26, 0
      %p136 = por %p134, %p135
      %p137 = scmp.ne.s32.totalorder %s123, %s124
      %p138 = scmp.eq.s32.totalorder %s27, 7
      %p139 = por %p137, %p138
      %p141 = scmp.ne.s32.totalorder %s124, %s140
      %p142 = scmp.eq.s32.totalorder %s27, 0
      %p143 = por %p141, %p142
      %s144 = ssub.s32 %s21, %s28
      %p145 = scmp.eq.s32.totalorder %s144, 0
      %s147 = sadd.s32 %s146, 1
      %s148 = scalar_select %p145, %s146, %s147
      %p151 = pneg %p145
      %p152 = scmp.eq.s32.totalorder %s21, 7
      %p153 = por %p151, %p152
      %p154 = scmp.ne.s32.totalorder %s146, %s149
      %p155 = scmp.eq.s32.totalorder %s21, 0
      %p156 = por %p154, %p155
      %p157 = scmp.ne.s32.totalorder %s146, %s149
      %p158 = scmp.eq.s32.totalorder %s26, 7
      %p159 = por %p157, %p158
      %p160 = scmp.ne.s32.totalorder %s149, %s150
      %p161 = scmp.eq.s32.totalorder %s26, 0
      %p162 = por %p160, %p161
      %p163 = scmp.ne.s32.totalorder %s149, %s150
      %p164 = scmp.eq.s32.totalorder %s27, 7
      %p165 = por %p163, %p164
      %p167 = scmp.ne.s32.totalorder %s150, %s166
      %p168 = scmp.eq.s32.totalorder %s27, 0
      %p169 = por %p167, %p168
      %p170 = scmp.le.s32.totalorder 1, %s21
      %p171 = scmp.lt.s32.totalorder %s21, 9
      %p172 = pnand %p170, %p171
      %p173 = pneg %p172
      // Predicated region
      $region9: #{tpu_custom_call.1} parent=5 // pred_check
        _
      $region10: #{tpu_custom_call.1} parent=5 // pred_check_branch
        %175 = sbr.rel (%p172) target = $region12
      $region11: #{tpu_custom_call.1} parent=5 // pred_region
        %s176 = ssub.s32 %s21, 1
        // Predicated region
        $region13: #{tpu_custom_call.1} parent=11 // pred_check
          %p177 = pneg %p42
        $region14: #{tpu_custom_call.1} parent=11 // pred_check_branch
          %179 = sbr.rel (%p177) target = $region16
        $region15: #{tpu_custom_call.1} parent=11 // pred_region
          %s181 = ssub.s32 16, 16
          %182 = vsyncadd [#allocation5], %s181
          %s184 = sshll.u32 %s0, 4
          %s185 = int_to_ptr.vmem [resolvable:$true] %s184
          %187 = dma.vmem_to_smem %s185, 16, [#allocation2], [#allocation5]
        $region16: #{tpu_custom_call.1} parent=11 // pred_fallthru
          _
        // Predicated region
        $region17: #{tpu_custom_call.1} parent=11 // pred_check
          %p188 = pneg %p63
        $region18: #{tpu_custom_call.1} parent=11 // pred_check_branch
          %190 = sbr.rel (%p188) target = $region20
        $region19: #{tpu_custom_call.1} parent=11 // pred_region
          _
        $region20: #{tpu_custom_call.1} parent=11 // pred_fallthru
          _
        // Predicated region
        $region21: #{tpu_custom_call.1} parent=11 // pred_check
          %p191 = pneg %p84
        $region22: #{tpu_custom_call.1} parent=11 // pred_check_branch
          %193 = sbr.rel (%p191) target = $region24
        $region23: #{tpu_custom_call.1} parent=11 // pred_region
          _
        $region24: #{tpu_custom_call.1} parent=11 // pred_fallthru
          _
      $region12: #{tpu_custom_call.1} parent=5 // pred_fallthru
        _
      %p194 = scmp.lt.s32.totalorder %s21, 8
      // Predicated region
      $region25: #{tpu_custom_call.1} parent=5 // pred_check
        %p195 = pneg %p194
      $region26: #{tpu_custom_call.1} parent=5 // pred_check_branch
        %197 = sbr.rel (%p195) target = $region28
      $region27: #{tpu_custom_call.1} parent=5 // pred_region
        // Predicated region
        $region29: #{tpu_custom_call.1} parent=27 // pred_check
          %p198 = pneg %p104
        $region30: #{tpu_custom_call.1} parent=27 // pred_check_branch
          %200 = sbr.rel (%p198) target = $region32
        $region31: #{tpu_custom_call.1} parent=27 // pred_region
          %s201 = sand.u32 %s94, 1
          %s202 = scalar_lea.sflag [#allocation3], %s201
          %s203 = sand.u32 %s94, 1
          %s204 = smul.addr %s203, 16
          %s205 = scalar_lea.vmem [#allocation6], %s204
          %s207 = ssub.s32 256, 256
          %208 = vsyncadd %s202, %s207
          %s209 = smul.addr %s21, 2
          %s210 = smul.addr %s209, 128
          %s211 = scalar_lea.hbm %s3, %s210
          %s212 = sshll.u32 %s205, 4
          %s213 = int_to_ptr.vmem [resolvable:$true] %s212
          %218 = dma.hbm_to_vmem [thread:$0]  %s211, 256, %s213, %s202, 128, 128, 8
        $region32: #{tpu_custom_call.1} parent=27 // pred_fallthru
          _
        // Predicated region
        $region33: #{tpu_custom_call.1} parent=27 // pred_check
          %p219 = pneg %p130
        $region34: #{tpu_custom_call.1} parent=27 // pred_check_branch
          %221 = sbr.rel (%p219) target = $region36
        $region35: #{tpu_custom_call.1} parent=27 // pred_region
          %s222 = sand.u32 %s120, 1
          %s223 = scalar_lea.sflag [#allocation8], %s222
          %s224 = sand.u32 %s120, 1
          %s225 = smul.addr %s224, 16
          %s226 = scalar_lea.vmem [#allocation7], %s225
          %s228 = ssub.s32 256, 256
          %229 = vsyncadd %s223, %s228
          %s230 = smul.addr %s21, 2
          %s231 = smul.addr %s230, 128
          %s232 = scalar_lea.hbm %s4, %s231
          %s233 = sshll.u32 %s226, 4
          %s234 = int_to_ptr.vmem [resolvable:$true] %s233
          %239 = dma.hbm_to_vmem [thread:$0]  %s232, 256, %s234, %s223, 128, 128, 8
        $region36: #{tpu_custom_call.1} parent=27 // pred_fallthru
          _
      $region28: #{tpu_custom_call.1} parent=5 // pred_fallthru
        _
      %p240 = scmp.le.s32.totalorder 1, %s21
      %p241 = scmp.lt.s32.totalorder %s21, 9
      %p242 = pnand %p240, %p241
      %p243 = pneg %p242
      // Predicated region
      $region37: #{tpu_custom_call.1} parent=5 // pred_check
        _
      $region38: #{tpu_custom_call.1} parent=5 // pred_check_branch
        %245 = sbr.rel (%p242) target = $region40
      $region39: #{tpu_custom_call.1} parent=5 // pred_region
        %s246 = ssub.s32 %s21, 1
        // Predicated region
        $region41: #{tpu_custom_call.1} parent=39 // pred_check
          %p247 = pneg %p42
        $region42: #{tpu_custom_call.1} parent=39 // pred_check_branch
          %249 = sbr.rel (%p247) target = $region44
        $region43: #{tpu_custom_call.1} parent=39 // pred_region
          %250 = dma.done [#allocation5], 16
        $region44: #{tpu_custom_call.1} parent=39 // pred_fallthru
          _
        %s251 = sand.u32 %s97, 1
        %s252 = scalar_lea.sflag [#allocation3], %s251
        %s253 = sand.u32 %s97, 1
        %s254 = smul.addr %s253, 16
        %s255 = scalar_lea.vmem [#allocation6], %s254
        // Predicated region
        $region45: #{tpu_custom_call.1} parent=39 // pred_check
          %p256 = pneg %p110
        $region46: #{tpu_custom_call.1} parent=39 // pred_check_branch
          %258 = sbr.rel (%p256) target = $region48
        $region47: #{tpu_custom_call.1} parent=39 // pred_region
          %259 = dma.done %s252, 256
        $region48: #{tpu_custom_call.1} parent=39 // pred_fallthru
          _
        %s260 = sand.u32 %s123, 1
        %s261 = scalar_lea.sflag [#allocation8], %s260
        %s262 = sand.u32 %s123, 1
        %s263 = smul.addr %s262, 16
        %s264 = scalar_lea.vmem [#allocation7], %s263
        // Predicated region
        $region49: #{tpu_custom_call.1} parent=39 // pred_check
          %p265 = pneg %p136
        $region50: #{tpu_custom_call.1} parent=39 // pred_check_branch
          %267 = sbr.rel (%p265) target = $region52
        $region51: #{tpu_custom_call.1} parent=39 // pred_region
          %268 = dma.done %s261, 256
        $region52: #{tpu_custom_call.1} parent=39 // pred_fallthru
          _
        %269 = sfence
        %p270 = pneg %p42
        %p271 = pneg %p39
        %p272 = pneg %p63
        %p273 = pneg %p60
        %p274 = pneg %p84
        %p275 = pneg %p81
        %s276 = sand.u32 %s97, 1
        %s277 = scalar_lea.sflag [#allocation3], %s276
        %s278 = sand.u32 %s97, 1
        %s279 = smul.addr %s278, 16
        %s280 = scalar_lea.vmem [#allocation6], %s279
        %p281 = pneg %p110
        %p282 = pneg %p107
        %s283 = sand.u32 %s123, 1
        %s284 = scalar_lea.sflag [#allocation8], %s283
        %s285 = sand.u32 %s123, 1
        %s286 = smul.addr %s285, 16
        %s287 = scalar_lea.vmem [#allocation7], %s286
        %p288 = pneg %p136
        %p289 = pneg %p133
        %p290 = pneg %p162
        %p291 = pneg %p159
        %s292 = sand.u32 %s149, 1
        %s293 = scalar_lea.sflag [#allocation4], %s292
        %s294 = sand.u32 %s149, 1
        %s295 = smul.addr %s294, 8
        %s296 = scalar_lea.vmem [#allocation9], %s295
        %s297 = sld [smem:[#allocation2]]
        %s298 = sld [smem:[#allocation2 + $0x1]]
        %v299 = vld [vmem:[%s1] sm:$0x3f]
        %v300 = vld [vmem:[%s2] sm:$0xff]
        %v301 = vld [vmem:[%s2 + $0x8] sm:$0xff]
        %v302 = vld [vmem:[%s255] sm:$0xff]
        %v303 = vld [vmem:[%s255 + $0x8] sm:$0xff]
        %v304 = vld [vmem:[%s264] sm:$0xff]
        %v305 = vld [vmem:[%s264 + $0x8] sm:$0xff]
        %v306 = vmul.f32 %v302, %v302
        %v307 = vmul.f32 %v303, %v303
        %v308 = vmul.f32 %v304, %v304
        %v309 = vmul.f32 %v305, %v305
        %v310 = vmul.f32 %v302, %v304
        %v311 = vmul.f32 %v303, %v305
        %vm312 = vcmask 130048
        %v314 = vsel %vm312, %v299, 0
        %316 = vmatprep.subr.mxu0 0.0
        %317 = vmatpush1.msra.mxu0 %v302
        %318 = vmatprep.subr.mxu0 0.0
        %319 = vmatpush1.msra.mxu0 %v303
        %320 = vmatprep.subr.mxu0 0.0
        %321 = vmatpush1.msra.mxu0 0.0
        %322 = vmatprep.subr.mxu0 0.0
        %323 = vmatpush1.msra.mxu0 0.0
        %324 = vmatprep.subr.mxu0 0.0
        %325 = vmatpush1.msra.mxu0 0.0
        %326 = vmatprep.subr.mxu0 0.0
        %327 = vmatpush1.msra.mxu0 0.0
        %328 = vmatprep.subr.mxu0 0.0
        %329 = vmatpush1.msra.mxu0 0.0
        %330 = vmatprep.subr.mxu0 0.0
        %331 = vmatpush1.msra.mxu0 0.0
        %332 = vmatprep.subr.mxu0 0.0
        %333 = vmatpush1.msra.mxu0 0.0
        %334 = vmatprep.subr.mxu0 0.0
        %335 = vmatpush1.msra.mxu0 0.0
        %336 = vmatprep.subr.mxu0 0.0
        %337 = vmatpush1.msra.mxu0 0.0
        %338 = vmatprep.subr.mxu0 0.0
        %339 = vmatpush1.msra.mxu0 0.0
        %340 = vmatprep.subr.mxu0 0.0
        %341 = vmatpush1.msra.mxu0 0.0
        %342 = vmatprep.subr.mxu0 0.0
        %343 = vmatpush1.msra.mxu0 0.0
        %344 = vmatprep.subr.mxu0 0.0
        %345 = vmatpush1.msra.mxu0 0.0
        %346 = vmatprep.subr.mxu0 0.0
        %347 = vmatpush1.msra.mxu0 0.0
        %348 = vmatprep.subr.mxu0 0.0
        %349 = vmatpush1.msra.mxu0 0.0
        %350 = vmatprep.subr.mxu0 0.0
        %351 = vmatpush1.msra.mxu0 0.0
        %352 = vmatprep.subr.mxu0 0.0
        %353 = vmatpush1.msra.mxu0 0.0
        %354 = vmatprep.subr.mxu0 0.0
        %355 = vmatpush1.msra.mxu0 0.0
        %356 = vmatprep.subr.mxu0 0.0
        %357 = vmatpush1.msra.mxu0 0.0
        %358 = vmatprep.subr.mxu0 0.0
        %359 = vmatpush1.msra.mxu0 0.0
        %360 = vmatprep.subr.mxu0 0.0
        %361 = vmatpush1.msra.mxu0 0.0
        %362 = vmatprep.subr.mxu0 0.0
        %363 = vmatpush1.msra.mxu0 0.0
        %364 = vmatprep.subr.mxu0 0.0
        %365 = vmatpush1.msra.mxu0 0.0
        %366 = vmatprep.subr.mxu0 0.0
        %367 = vmatpush1.msra.mxu0 0.0
        %368 = vmatprep.subr.mxu0 0.0
        %369 = vmatpush1.msra.mxu0 0.0
        %370 = vmatprep.subr.mxu0 0.0
        %371 = vmatpush1.msra.mxu0 0.0
        %372 = vmatprep.subr.mxu0 0.0
        %373 = vmatpush1.msra.mxu0 0.0
        %374 = vmatprep.subr.mxu0 0.0
        %375 = vmatpush1.msra.mxu0 0.0
        %376 = vmatprep.subr.mxu0 0.0
        %377 = vmatpush1.msra.mxu0 0.0
        %378 = vmatprep.subr.mxu0 0.0
        %379 = vmatpush1.msra.mxu0 0.0
        %380 = vmatprep.mubr.f32.mxu0 0.0
        %381 = vmatmul.mubr.f32.gmra.mrb[0].mxu0 %v314
        %v382 = vpop.f32.mrb[0].mxu0
        %v383 = vadd.f32 0.0, %v382
        %v384 = vpop.f32.mrb[0].mxu0
        %385 = vdwg.mxu0
        %v387 = vsel %vm312, %v383, 0
        %389 = vmatprep.subr.mxu0 0.0
        %390 = vmatpush1.msra.mxu0 %v300
        %391 = vmatprep.subr.mxu0 0.0
        %392 = vmatpush1.msra.mxu0 %v301
        %393 = vmatprep.subr.mxu0 0.0
        %394 = vmatpush1.msra.mxu0 0.0
        %395 = vmatprep.subr.mxu0 0.0
        %396 = vmatpush1.msra.mxu0 0.0
        %397 = vmatprep.subr.mxu0 0.0
        %398 = vmatpush1.msra.mxu0 0.0
        %399 = vmatprep.subr.mxu0 0.0
        %400 = vmatpush1.msra.mxu0 0.0
        %401 = vmatprep.subr.mxu0 0.0
        %402 = vmatpush1.msra.mxu0 0.0
        %403 = vmatprep.subr.mxu0 0.0
        %404 = vmatpush1.msra.mxu0 0.0
        %405 = vmatprep.subr.mxu0 0.0
        %406 = vmatpush1.msra.mxu0 0.0
        %407 = vmatprep.subr.mxu0 0.0
        %408 = vmatpush1.msra.mxu0 0.0
        %409 = vmatprep.subr.mxu0 0.0
        %410 = vmatpush1.msra.mxu0 0.0
        %411 = vmatprep.subr.mxu0 0.0
        %412 = vmatpush1.msra.mxu0 0.0
        %413 = vmatprep.subr.mxu0 0.0
        %414 = vmatpush1.msra.mxu0 0.0
        %415 = vmatprep.subr.mxu0 0.0
        %416 = vmatpush1.msra.mxu0 0.0
        %417 = vmatprep.subr.mxu0 0.0
        %418 = vmatpush1.msra.mxu0 0.0
        %419 = vmatprep.subr.mxu0 0.0
        %420 = vmatpush1.msra.mxu0 0.0
        %421 = vmatprep.subr.mxu0 0.0
        %422 = vmatpush1.msra.mxu0 0.0
        %423 = vmatprep.subr.mxu0 0.0
        %424 = vmatpush1.msra.mxu0 0.0
        %425 = vmatprep.subr.mxu0 0.0
        %426 = vmatpush1.msra.mxu0 0.0
        %427 = vmatprep.subr.mxu0 0.0
        %428 = vmatpush1.msra.mxu0 0.0
        %429 = vmatprep.subr.mxu0 0.0
        %430 = vmatpush1.msra.mxu0 0.0
        %431 = vmatprep.subr.mxu0 0.0
        %432 = vmatpush1.msra.mxu0 0.0
        %433 = vmatprep.subr.mxu0 0.0
        %434 = vmatpush1.msra.mxu0 0.0
        %435 = vmatprep.subr.mxu0 0.0
        %436 = vmatpush1.msra.mxu0 0.0
        %437 = vmatprep.subr.mxu0 0.0
        %438 = vmatpush1.msra.mxu0 0.0
        %439 = vmatprep.subr.mxu0 0.0
        %440 = vmatpush1.msra.mxu0 0.0
        %441 = vmatprep.subr.mxu0 0.0
        %442 = vmatpush1.msra.mxu0 0.0
        %443 = vmatprep.subr.mxu0 0.0
        %444 = vmatpush1.msra.mxu0 0.0
        %445 = vmatprep.subr.mxu0 0.0
        %446 = vmatpush1.msra.mxu0 0.0
        %447 = vmatprep.subr.mxu0 0.0
        %448 = vmatpush1.msra.mxu0 0.0
        %449 = vmatprep.subr.mxu0 0.0
        %450 = vmatpush1.msra.mxu0 0.0
        %451 = vmatprep.subr.mxu0 0.0
        %452 = vmatpush1.msra.mxu0 0.0
        %453 = vmatprep.mubr.f32.mxu0 0.0
        %454 = vmatmul.mubr.f32.gmra.mrb[0].mxu0 %v387
        %v455 = vpop.f32.mrb[0].mxu0
        %v456 = vadd.f32 0.0, %v455
        %v457 = vpop.f32.mrb[0].mxu0
        %458 = vdwg.mxu0
        %459 = vmatprep.subr.mxu0 0.0
        %460 = vmatpush1.msra.mxu0 %v304
        %461 = vmatprep.subr.mxu0 0.0
        %462 = vmatpush1.msra.mxu0 %v305
        %463 = vmatprep.subr.mxu0 0.0
        %464 = vmatpush1.msra.mxu0 0.0
        %465 = vmatprep.subr.mxu0 0.0
        %466 = vmatpush1.msra.mxu0 0.0
        %467 = vmatprep.subr.mxu0 0.0
        %468 = vmatpush1.msra.mxu0 0.0
        %469 = vmatprep.subr.mxu0 0.0
        %470 = vmatpush1.msra.mxu0 0.0
        %471 = vmatprep.subr.mxu0 0.0
        %472 = vmatpush1.msra.mxu0 0.0
        %473 = vmatprep.subr.mxu0 0.0
        %474 = vmatpush1.msra.mxu0 0.0
        %475 = vmatprep.subr.mxu0 0.0
        %476 = vmatpush1.msra.mxu0 0.0
        %477 = vmatprep.subr.mxu0 0.0
        %478 = vmatpush1.msra.mxu0 0.0
        %479 = vmatprep.subr.mxu0 0.0
        %480 = vmatpush1.msra.mxu0 0.0
        %481 = vmatprep.subr.mxu0 0.0
        %482 = vmatpush1.msra.mxu0 0.0
        %483 = vmatprep.subr.mxu0 0.0
        %484 = vmatpush1.msra.mxu0 0.0
        %485 = vmatprep.subr.mxu0 0.0
        %486 = vmatpush1.msra.mxu0 0.0
        %487 = vmatprep.subr.mxu0 0.0
        %488 = vmatpush1.msra.mxu0 0.0
        %489 = vmatprep.subr.mxu0 0.0
        %490 = vmatpush1.msra.mxu0 0.0
        %491 = vmatprep.subr.mxu0 0.0
        %492 = vmatpush1.msra.mxu0 0.0
        %493 = vmatprep.subr.mxu0 0.0
        %494 = vmatpush1.msra.mxu0 0.0
        %495 = vmatprep.subr.mxu0 0.0
        %496 = vmatpush1.msra.mxu0 0.0
        %497 = vmatprep.subr.mxu0 0.0
        %498 = vmatpush1.msra.mxu0 0.0
        %499 = vmatprep.subr.mxu0 0.0
        %500 = vmatpush1.msra.mxu0 0.0
        %501 = vmatprep.subr.mxu0 0.0
        %502 = vmatpush1.msra.mxu0 0.0
        %503 = vmatprep.subr.mxu0 0.0
        %504 = vmatpush1.msra.mxu0 0.0
        %505 = vmatprep.subr.mxu0 0.0
        %506 = vmatpush1.msra.mxu0 0.0
        %507 = vmatprep.subr.mxu0 0.0
        %508 = vmatpush1.msra.mxu0 0.0
        %509 = vmatprep.subr.mxu0 0.0
        %510 = vmatpush1.msra.mxu0 0.0
        %511 = vmatprep.subr.mxu0 0.0
        %512 = vmatpush1.msra.mxu0 0.0
        %513 = vmatprep.subr.mxu0 0.0
        %514 = vmatpush1.msra.mxu0 0.0
        %515 = vmatprep.subr.mxu0 0.0
        %516 = vmatpush1.msra.mxu0 0.0
        %517 = vmatprep.subr.mxu0 0.0
        %518 = vmatpush1.msra.mxu0 0.0
        %519 = vmatprep.subr.mxu0 0.0
        %520 = vmatpush1.msra.mxu0 0.0
        %521 = vmatprep.subr.mxu0 0.0
        %522 = vmatpush1.msra.mxu0 0.0
        %523 = vmatprep.mubr.f32.mxu0 0.0
        %524 = vmatmul.mubr.f32.gmra.mrb[0].mxu0 %v314
        %v525 = vpop.f32.mrb[0].mxu0
        %v526 = vadd.f32 0.0, %v525
        %v527 = vpop.f32.mrb[0].mxu0
        %528 = vdwg.mxu0
        %v530 = vsel %vm312, %v526, 0
        %532 = vmatprep.subr.mxu0 0.0
        %533 = vmatpush1.msra.mxu0 %v300
        %534 = vmatprep.subr.mxu0 0.0
        %535 = vmatpush1.msra.mxu0 %v301
        %536 = vmatprep.subr.mxu0 0.0
        %537 = vmatpush1.msra.mxu0 0.0
        %538 = vmatprep.subr.mxu0 0.0
        %539 = vmatpush1.msra.mxu0 0.0
        %540 = vmatprep.subr.mxu0 0.0
        %541 = vmatpush1.msra.mxu0 0.0
        %542 = vmatprep.subr.mxu0 0.0
        %543 = vmatpush1.msra.mxu0 0.0
        %544 = vmatprep.subr.mxu0 0.0
        %545 = vmatpush1.msra.mxu0 0.0
        %546 = vmatprep.subr.mxu0 0.0
        %547 = vmatpush1.msra.mxu0 0.0
        %548 = vmatprep.subr.mxu0 0.0
        %549 = vmatpush1.msra.mxu0 0.0
        %550 = vmatprep.subr.mxu0 0.0
        %551 = vmatpush1.msra.mxu0 0.0
        %552 = vmatprep.subr.mxu0 0.0
        %553 = vmatpush1.msra.mxu0 0.0
        %554 = vmatprep.subr.mxu0 0.0
        %555 = vmatpush1.msra.mxu0 0.0
        %556 = vmatprep.subr.mxu0 0.0
        %557 = vmatpush1.msra.mxu0 0.0
        %558 = vmatprep.subr.mxu0 0.0
        %559 = vmatpush1.msra.mxu0 0.0
        %560 = vmatprep.subr.mxu0 0.0
        %561 = vmatpush1.msra.mxu0 0.0
        %562 = vmatprep.subr.mxu0 0.0
        %563 = vmatpush1.msra.mxu0 0.0
        %564 = vmatprep.subr.mxu0 0.0
        %565 = vmatpush1.msra.mxu0 0.0
        %566 = vmatprep.subr.mxu0 0.0
        %567 = vmatpush1.msra.mxu0 0.0
        %568 = vmatprep.subr.mxu0 0.0
        %569 = vmatpush1.msra.mxu0 0.0
        %570 = vmatprep.subr.mxu0 0.0
        %571 = vmatpush1.msra.mxu0 0.0
        %572 = vmatprep.subr.mxu0 0.0
        %573 = vmatpush1.msra.mxu0 0.0
        %574 = vmatprep.subr.mxu0 0.0
        %575 = vmatpush1.msra.mxu0 0.0
        %576 = vmatprep.subr.mxu0 0.0
        %577 = vmatpush1.msra.mxu0 0.0
        %578 = vmatprep.subr.mxu0 0.0
        %579 = vmatpush1.msra.mxu0 0.0
        %580 = vmatprep.subr.mxu0 0.0
        %581 = vmatpush1.msra.mxu0 0.0
        %582 = vmatprep.subr.mxu0 0.0
        %583 = vmatpush1.msra.mxu0 0.0
        %584 = vmatprep.subr.mxu0 0.0
        %585 = vmatpush1.msra.mxu0 0.0
        %586 = vmatprep.subr.mxu0 0.0
        %587 = vmatpush1.msra.mxu0 0.0
        %588 = vmatprep.subr.mxu0 0.0
        %589 = vmatpush1.msra.mxu0 0.0
        %590 = vmatprep.subr.mxu0 0.0
        %591 = vmatpush1.msra.mxu0 0.0
        %592 = vmatprep.subr.mxu0 0.0
        %593 = vmatpush1.msra.mxu0 0.0
        %594 = vmatprep.subr.mxu0 0.0
        %595 = vmatpush1.msra.mxu0 0.0
        %596 = vmatprep.mubr.f32.mxu0 0.0
        %597 = vmatmul.mubr.f32.gmra.mrb[0].mxu0 %v530
        %v598 = vpop.f32.mrb[0].mxu0
        %v599 = vadd.f32 0.0, %v598
        %v600 = vpop.f32.mrb[0].mxu0
        %601 = vdwg.mxu0
        %602 = vmatprep.subr.mxu0 0.0
        %603 = vmatpush1.msra.mxu0 %v306
        %604 = vmatprep.subr.mxu0 0.0
        %605 = vmatpush1.msra.mxu0 %v307
        %606 = vmatprep.subr.mxu0 0.0
        %607 = vmatpush1.msra.mxu0 0.0
        %608 = vmatprep.subr.mxu0 0.0
        %609 = vmatpush1.msra.mxu0 0.0
        %610 = vmatprep.subr.mxu0 0.0
        %611 = vmatpush1.msra.mxu0 0.0
        %612 = vmatprep.subr.mxu0 0.0
        %613 = vmatpush1.msra.mxu0 0.0
        %614 = vmatprep.subr.mxu0 0.0
        %615 = vmatpush1.msra.mxu0 0.0
        %616 = vmatprep.subr.mxu0 0.0
        %617 = vmatpush1.msra.mxu0 0.0
        %618 = vmatprep.subr.mxu0 0.0
        %619 = vmatpush1.msra.mxu0 0.0
        %620 = vmatprep.subr.mxu0 0.0
        %621 = vmatpush1.msra.mxu0 0.0
        %622 = vmatprep.subr.mxu0 0.0
        %623 = vmatpush1.msra.mxu0 0.0
        %624 = vmatprep.subr.mxu0 0.0
        %625 = vmatpush1.msra.mxu0 0.0
        %626 = vmatprep.subr.mxu0 0.0
        %627 = vmatpush1.msra.mxu0 0.0
        %628 = vmatprep.subr.mxu0 0.0
        %629 = vmatpush1.msra.mxu0 0.0
        %630 = vmatprep.subr.mxu0 0.0
        %631 = vmatpush1.msra.mxu0 0.0
        %632 = vmatprep.subr.mxu0 0.0
        %633 = vmatpush1.msra.mxu0 0.0
        %634 = vmatprep.subr.mxu0 0.0
        %635 = vmatpush1.msra.mxu0 0.0
        %636 = vmatprep.subr.mxu0 0.0
        %637 = vmatpush1.msra.mxu0 0.0
        %638 = vmatprep.subr.mxu0 0.0
        %639 = vmatpush1.msra.mxu0 0.0
        %640 = vmatprep.subr.mxu0 0.0
        %641 = vmatpush1.msra.mxu0 0.0
        %642 = vmatprep.subr.mxu0 0.0
        %643 = vmatpush1.msra.mxu0 0.0
        %644 = vmatprep.subr.mxu0 0.0
        %645 = vmatpush1.msra.mxu0 0.0
        %646 = vmatprep.subr.mxu0 0.0
        %647 = vmatpush1.msra.mxu0 0.0
        %648 = vmatprep.subr.mxu0 0.0
        %649 = vmatpush1.msra.mxu0 0.0
        %650 = vmatprep.subr.mxu0 0.0
        %651 = vmatpush1.msra.mxu0 0.0
        %652 = vmatprep.subr.mxu0 0.0
        %653 = vmatpush1.msra.mxu0 0.0
        %654 = vmatprep.subr.mxu0 0.0
        %655 = vmatpush1.msra.mxu0 0.0
        %656 = vmatprep.subr.mxu0 0.0
        %657 = vmatpush1.msra.mxu0 0.0
        %658 = vmatprep.subr.mxu0 0.0
        %659 = vmatpush1.msra.mxu0 0.0
        %660 = vmatprep.subr.mxu0 0.0
        %661 = vmatpush1.msra.mxu0 0.0
        %662 = vmatprep.subr.mxu0 0.0
        %663 = vmatpush1.msra.mxu0 0.0
        %664 = vmatprep.subr.mxu0 0.0
        %665 = vmatpush1.msra.mxu0 0.0
        %666 = vmatprep.mubr.f32.mxu0 0.0
        %667 = vmatmul.mubr.f32.gmra.mrb[0].mxu0 %v314
        %v668 = vpop.f32.mrb[0].mxu0
        %v669 = vadd.f32 0.0, %v668
        %v670 = vpop.f32.mrb[0].mxu0
        %671 = vdwg.mxu0
        %v673 = vsel %vm312, %v669, 0
        %675 = vmatprep.subr.mxu0 0.0
        %676 = vmatpush1.msra.mxu0 %v300
        %677 = vmatprep.subr.mxu0 0.0
        %678 = vmatpush1.msra.mxu0 %v301
        %679 = vmatprep.subr.mxu0 0.0
        %680 = vmatpush1.msra.mxu0 0.0
        %681 = vmatprep.subr.mxu0 0.0
        %682 = vmatpush1.msra.mxu0 0.0
        %683 = vmatprep.subr.mxu0 0.0
        %684 = vmatpush1.msra.mxu0 0.0
        %685 = vmatprep.subr.mxu0 0.0
        %686 = vmatpush1.msra.mxu0 0.0
        %687 = vmatprep.subr.mxu0 0.0
        %688 = vmatpush1.msra.mxu0 0.0
        %689 = vmatprep.subr.mxu0 0.0
        %690 = vmatpush1.msra.mxu0 0.0
        %691 = vmatprep.subr.mxu0 0.0
        %692 = vmatpush1.msra.mxu0 0.0
        %693 = vmatprep.subr.mxu0 0.0
        %694 = vmatpush1.msra.mxu0 0.0
        %695 = vmatprep.subr.mxu0 0.0
        %696 = vmatpush1.msra.mxu0 0.0
        %697 = vmatprep.subr.mxu0 0.0
        %698 = vmatpush1.msra.mxu0 0.0
        %699 = vmatprep.subr.mxu0 0.0
        %700 = vmatpush1.msra.mxu0 0.0
        %701 = vmatprep.subr.mxu0 0.0
        %702 = vmatpush1.msra.mxu0 0.0
        %703 = vmatprep.subr.mxu0 0.0
        %704 = vmatpush1.msra.mxu0 0.0
        %705 = vmatprep.subr.mxu0 0.0
        %706 = vmatpush1.msra.mxu0 0.0
        %707 = vmatprep.subr.mxu0 0.0
        %708 = vmatpush1.msra.mxu0 0.0
        %709 = vmatprep.subr.mxu0 0.0
        %710 = vmatpush1.msra.mxu0 0.0
        %711 = vmatprep.subr.mxu0 0.0
        %712 = vmatpush1.msra.mxu0 0.0
        %713 = vmatprep.subr.mxu0 0.0
        %714 = vmatpush1.msra.mxu0 0.0
        %715 = vmatprep.subr.mxu0 0.0
        %716 = vmatpush1.msra.mxu0 0.0
        %717 = vmatprep.subr.mxu0 0.0
        %718 = vmatpush1.msra.mxu0 0.0
        %719 = vmatprep.subr.mxu0 0.0
        %720 = vmatpush1.msra.mxu0 0.0
        %721 = vmatprep.subr.mxu0 0.0
        %722 = vmatpush1.msra.mxu0 0.0
        %723 = vmatprep.subr.mxu0 0.0
        %724 = vmatpush1.msra.mxu0 0.0
        %725 = vmatprep.subr.mxu0 0.0
        %726 = vmatpush1.msra.mxu0 0.0
        %727 = vmatprep.subr.mxu0 0.0
        %728 = vmatpush1.msra.mxu0 0.0
        %729 = vmatprep.subr.mxu0 0.0
        %730 = vmatpush1.msra.mxu0 0.0
        %731 = vmatprep.subr.mxu0 0.0
        %732 = vmatpush1.msra.mxu0 0.0
        %733 = vmatprep.subr.mxu0 0.0
        %734 = vmatpush1.msra.mxu0 0.0
        %735 = vmatprep.subr.mxu0 0.0
        %736 = vmatpush1.msra.mxu0 0.0
        %737 = vmatprep.subr.mxu0 0.0
        %738 = vmatpush1.msra.mxu0 0.0
        %739 = vmatprep.mubr.f32.mxu0 0.0
        %740 = vmatmul.mubr.f32.gmra.mrb[0].mxu0 %v673
        %v741 = vpop.f32.mrb[0].mxu0
        %v742 = vadd.f32 0.0, %v741
        %v743 = vpop.f32.mrb[0].mxu0
        %744 = vdwg.mxu0
        %745 = vmatprep.subr.mxu0 0.0
        %746 = vmatpush1.msra.mxu0 %v308
        %747 = vmatprep.subr.mxu0 0.0
        %748 = vmatpush1.msra.mxu0 %v309
        %749 = vmatprep.subr.mxu0 0.0
        %750 = vmatpush1.msra.mxu0 0.0
        %751 = vmatprep.subr.mxu0 0.0
        %752 = vmatpush1.msra.mxu0 0.0
        %753 = vmatprep.subr.mxu0 0.0
        %754 = vmatpush1.msra.mxu0 0.0
        %755 = vmatprep.subr.mxu0 0.0
        %756 = vmatpush1.msra.mxu0 0.0
        %757 = vmatprep.subr.mxu0 0.0
        %758 = vmatpush1.msra.mxu0 0.0
        %759 = vmatprep.subr.mxu0 0.0
        %760 = vmatpush1.msra.mxu0 0.0
        %761 = vmatprep.subr.mxu0 0.0
        %762 = vmatpush1.msra.mxu0 0.0
        %763 = vmatprep.subr.mxu0 0.0
        %764 = vmatpush1.msra.mxu0 0.0
        %765 = vmatprep.subr.mxu0 0.0
        %766 = vmatpush1.msra.mxu0 0.0
        %767 = vmatprep.subr.mxu0 0.0
        %768 = vmatpush1.msra.mxu0 0.0
        %769 = vmatprep.subr.mxu0 0.0
        %770 = vmatpush1.msra.mxu0 0.0
        %771 = vmatprep.subr.mxu0 0.0
        %772 = vmatpush1.msra.mxu0 0.0
        %773 = vmatprep.subr.mxu0 0.0
        %774 = vmatpush1.msra.mxu0 0.0
        %775 = vmatprep.subr.mxu0 0.0
        %776 = vmatpush1.msra.mxu0 0.0
        %777 = vmatprep.subr.mxu0 0.0
        %778 = vmatpush1.msra.mxu0 0.0
        %779 = vmatprep.subr.mxu0 0.0
        %780 = vmatpush1.msra.mxu0 0.0
        %781 = vmatprep.subr.mxu0 0.0
        %782 = vmatpush1.msra.mxu0 0.0
        %783 = vmatprep.subr.mxu0 0.0
        %784 = vmatpush1.msra.mxu0 0.0
        %785 = vmatprep.subr.mxu0 0.0
        %786 = vmatpush1.msra.mxu0 0.0
        %787 = vmatprep.subr.mxu0 0.0
        %788 = vmatpush1.msra.mxu0 0.0
        %789 = vmatprep.subr.mxu0 0.0
        %790 = vmatpush1.msra.mxu0 0.0
        %791 = vmatprep.subr.mxu0 0.0
        %792 = vmatpush1.msra.mxu0 0.0
        %793 = vmatprep.subr.mxu0 0.0
        %794 = vmatpush1.msra.mxu0 0.0
        %795 = vmatprep.subr.mxu0 0.0
        %796 = vmatpush1.msra.mxu0 0.0
        %797 = vmatprep.subr.mxu0 0.0
        %798 = vmatpush1.msra.mxu0 0.0
        %799 = vmatprep.subr.mxu0 0.0
        %800 = vmatpush1.msra.mxu0 0.0
        %801 = vmatprep.subr.mxu0 0.0
        %802 = vmatpush1.msra.mxu0 0.0
        %803 = vmatprep.subr.mxu0 0.0
        %804 = vmatpush1.msra.mxu0 0.0
        %805 = vmatprep.subr.mxu0 0.0
        %806 = vmatpush1.msra.mxu0 0.0
        %807 = vmatprep.subr.mxu0 0.0
        %808 = vmatpush1.msra.mxu0 0.0
        %809 = vmatprep.mubr.f32.mxu0 0.0
        %810 = vmatmul.mubr.f32.gmra.mrb[0].mxu0 %v314
        %v811 = vpop.f32.mrb[0].mxu0
        %v812 = vadd.f32 0.0, %v811
        %v813 = vpop.f32.mrb[0].mxu0
        %814 = vdwg.mxu0
        %v816 = vsel %vm312, %v812, 0
        %818 = vmatprep.subr.mxu0 0.0
        %819 = vmatpush1.msra.mxu0 %v300
        %820 = vmatprep.subr.mxu0 0.0
        %821 = vmatpush1.msra.mxu0 %v301
        %822 = vmatprep.subr.mxu0 0.0
        %823 = vmatpush1.msra.mxu0 0.0
        %824 = vmatprep.subr.mxu0 0.0
        %825 = vmatpush1.msra.mxu0 0.0
        %826 = vmatprep.subr.mxu0 0.0
        %827 = vmatpush1.msra.mxu0 0.0
        %828 = vmatprep.subr.mxu0 0.0
        %829 = vmatpush1.msra.mxu0 0.0
        %830 = vmatprep.subr.mxu0 0.0
        %831 = vmatpush1.msra.mxu0 0.0
        %832 = vmatprep.subr.mxu0 0.0
        %833 = vmatpush1.msra.mxu0 0.0
        %834 = vmatprep.subr.mxu0 0.0
        %835 = vmatpush1.msra.mxu0 0.0
        %836 = vmatprep.subr.mxu0 0.0
        %837 = vmatpush1.msra.mxu0 0.0
        %838 = vmatprep.subr.mxu0 0.0
        %839 = vmatpush1.msra.mxu0 0.0
        %840 = vmatprep.subr.mxu0 0.0
        %841 = vmatpush1.msra.mxu0 0.0
        %842 = vmatprep.subr.mxu0 0.0
        %843 = vmatpush1.msra.mxu0 0.0
        %844 = vmatprep.subr.mxu0 0.0
        %845 = vmatpush1.msra.mxu0 0.0
        %846 = vmatprep.subr.mxu0 0.0
        %847 = vmatpush1.msra.mxu0 0.0
        %848 = vmatprep.subr.mxu0 0.0
        %849 = vmatpush1.msra.mxu0 0.0
        %850 = vmatprep.subr.mxu0 0.0
        %851 = vmatpush1.msra.mxu0 0.0
        %852 = vmatprep.subr.mxu0 0.0
        %853 = vmatpush1.msra.mxu0 0.0
        %854 = vmatprep.subr.mxu0 0.0
        %855 = vmatpush1.msra.mxu0 0.0
        %856 = vmatprep.subr.mxu0 0.0
        %857 = vmatpush1.msra.mxu0 0.0
        %858 = vmatprep.subr.mxu0 0.0
        %859 = vmatpush1.msra.mxu0 0.0
        %860 = vmatprep.subr.mxu0 0.0
        %861 = vmatpush1.msra.mxu0 0.0
        %862 = vmatprep.subr.mxu0 0.0
        %863 = vmatpush1.msra.mxu0 0.0
        %864 = vmatprep.subr.mxu0 0.0
        %865 = vmatpush1.msra.mxu0 0.0
        %866 = vmatprep.subr.mxu0 0.0
        %867 = vmatpush1.msra.mxu0 0.0
        %868 = vmatprep.subr.mxu0 0.0
        %869 = vmatpush1.msra.mxu0 0.0
        %870 = vmatprep.subr.mxu0 0.0
        %871 = vmatpush1.msra.mxu0 0.0
        %872 = vmatprep.subr.mxu0 0.0
        %873 = vmatpush1.msra.mxu0 0.0
        %874 = vmatprep.subr.mxu0 0.0
        %875 = vmatpush1.msra.mxu0 0.0
        %876 = vmatprep.subr.mxu0 0.0
        %877 = vmatpush1.msra.mxu0 0.0
        %878 = vmatprep.subr.mxu0 0.0
        %879 = vmatpush1.msra.mxu0 0.0
        %880 = vmatprep.subr.mxu0 0.0
        %881 = vmatpush1.msra.mxu0 0.0
        %882 = vmatprep.mubr.f32.mxu0 0.0
        %883 = vmatmul.mubr.f32.gmra.mrb[0].mxu0 %v816
        %v884 = vpop.f32.mrb[0].mxu0
        %v885 = vadd.f32 0.0, %v884
        %v886 = vpop.f32.mrb[0].mxu0
        %887 = vdwg.mxu0
        %888 = vmatprep.subr.mxu0 0.0
        %889 = vmatpush1.msra.mxu0 %v310
        %890 = vmatprep.subr.mxu0 0.0
        %891 = vmatpush1.msra.mxu0 %v311
        %892 = vmatprep.subr.mxu0 0.0
        %893 = vmatpush1.msra.mxu0 0.0
        %894 = vmatprep.subr.mxu0 0.0
        %895 = vmatpush1.msra.mxu0 0.0
        %896 = vmatprep.subr.mxu0 0.0
        %897 = vmatpush1.msra.mxu0 0.0
        %898 = vmatprep.subr.mxu0 0.0
        %899 = vmatpush1.msra.mxu0 0.0
        %900 = vmatprep.subr.mxu0 0.0
        %901 = vmatpush1.msra.mxu0 0.0
        %902 = vmatprep.subr.mxu0 0.0
        %903 = vmatpush1.msra.mxu0 0.0
        %904 = vmatprep.subr.mxu0 0.0
        %905 = vmatpush1.msra.mxu0 0.0
        %906 = vmatprep.subr.mxu0 0.0
        %907 = vmatpush1.msra.mxu0 0.0
        %908 = vmatprep.subr.mxu0 0.0
        %909 = vmatpush1.msra.mxu0 0.0
        %910 = vmatprep.subr.mxu0 0.0
        %911 = vmatpush1.msra.mxu0 0.0
        %912 = vmatprep.subr.mxu0 0.0
        %913 = vmatpush1.msra.mxu0 0.0
        %914 = vmatprep.subr.mxu0 0.0
        %915 = vmatpush1.msra.mxu0 0.0
        %916 = vmatprep.subr.mxu0 0.0
        %917 = vmatpush1.msra.mxu0 0.0
        %918 = vmatprep.subr.mxu0 0.0
        %919 = vmatpush1.msra.mxu0 0.0
        %920 = vmatprep.subr.mxu0 0.0
        %921 = vmatpush1.msra.mxu0 0.0
        %922 = vmatprep.subr.mxu0 0.0
        %923 = vmatpush1.msra.mxu0 0.0
        %924 = vmatprep.subr.mxu0 0.0
        %925 = vmatpush1.msra.mxu0 0.0
        %926 = vmatprep.subr.mxu0 0.0
        %927 = vmatpush1.msra.mxu0 0.0
        %928 = vmatprep.subr.mxu0 0.0
        %929 = vmatpush1.msra.mxu0 0.0
        %930 = vmatprep.subr.mxu0 0.0
        %931 = vmatpush1.msra.mxu0 0.0
        %932 = vmatprep.subr.mxu0 0.0
        %933 = vmatpush1.msra.mxu0 0.0
        %934 = vmatprep.subr.mxu0 0.0
        %935 = vmatpush1.msra.mxu0 0.0
        %936 = vmatprep.subr.mxu0 0.0
        %937 = vmatpush1.msra.mxu0 0.0
        %938 = vmatprep.subr.mxu0 0.0
        %939 = vmatpush1.msra.mxu0 0.0
        %940 = vmatprep.subr.mxu0 0.0
        %941 = vmatpush1.msra.mxu0 0.0
        %942 = vmatprep.subr.mxu0 0.0
        %943 = vmatpush1.msra.mxu0 0.0
        %944 = vmatprep.subr.mxu0 0.0
        %945 = vmatpush1.msra.mxu0 0.0
        %946 = vmatprep.subr.mxu0 0.0
        %947 = vmatpush1.msra.mxu0 0.0
        %948 = vmatprep.subr.mxu0 0.0
        %949 = vmatpush1.msra.mxu0 0.0
        %950 = vmatprep.subr.mxu0 0.0
        %951 = vmatpush1.msra.mxu0 0.0
        %952 = vmatprep.mubr.f32.mxu0 0.0
        %953 = vmatmul.mubr.f32.gmra.mrb[0].mxu0 %v314
        %v954 = vpop.f32.mrb[0].mxu0
        %v955 = vadd.f32 0.0, %v954
        %v956 = vpop.f32.mrb[0].mxu0
        %957 = vdwg.mxu0
        %v959 = vsel %vm312, %v955, 0
        %961 = vmatprep.subr.mxu0 0.0
        %962 = vmatpush1.msra.mxu0 %v300
        %963 = vmatprep.subr.mxu0 0.0
        %964 = vmatpush1.msra.mxu0 %v301
        %965 = vmatprep.subr.mxu0 0.0
        %966 = vmatpush1.msra.mxu0 0.0
        %967 = vmatprep.subr.mxu0 0.0
        %968 = vmatpush1.msra.mxu0 0.0
        %969 = vmatprep.subr.mxu0 0.0
        %970 = vmatpush1.msra.mxu0 0.0
        %971 = vmatprep.subr.mxu0 0.0
        %972 = vmatpush1.msra.mxu0 0.0
        %973 = vmatprep.subr.mxu0 0.0
        %974 = vmatpush1.msra.mxu0 0.0
        %975 = vmatprep.subr.mxu0 0.0
        %976 = vmatpush1.msra.mxu0 0.0
        %977 = vmatprep.subr.mxu0 0.0
        %978 = vmatpush1.msra.mxu0 0.0
        %979 = vmatprep.subr.mxu0 0.0
        %980 = vmatpush1.msra.mxu0 0.0
        %981 = vmatprep.subr.mxu0 0.0
        %982 = vmatpush1.msra.mxu0 0.0
        %983 = vmatprep.subr.mxu0 0.0
        %984 = vmatpush1.msra.mxu0 0.0
        %985 = vmatprep.subr.mxu0 0.0
        %986 = vmatpush1.msra.mxu0 0.0
        %987 = vmatprep.subr.mxu0 0.0
        %988 = vmatpush1.msra.mxu0 0.0
        %989 = vmatprep.subr.mxu0 0.0
        %990 = vmatpush1.msra.mxu0 0.0
        %991 = vmatprep.subr.mxu0 0.0
        %992 = vmatpush1.msra.mxu0 0.0
        %993 = vmatprep.subr.mxu0 0.0
        %994 = vmatpush1.msra.mxu0 0.0
        %995 = vmatprep.subr.mxu0 0.0
        %996 = vmatpush1.msra.mxu0 0.0
        %997 = vmatprep.subr.mxu0 0.0
        %998 = vmatpush1.msra.mxu0 0.0
        %999 = vmatprep.subr.mxu0 0.0
        %1000 = vmatpush1.msra.mxu0 0.0
        %1001 = vmatprep.subr.mxu0 0.0
        %1002 = vmatpush1.msra.mxu0 0.0
        %1003 = vmatprep.subr.mxu0 0.0
        %1004 = vmatpush1.msra.mxu0 0.0
        %1005 = vmatprep.subr.mxu0 0.0
        %1006 = vmatpush1.msra.mxu0 0.0
        %1007 = vmatprep.subr.mxu0 0.0
        %1008 = vmatpush1.msra.mxu0 0.0
        %1009 = vmatprep.subr.mxu0 0.0
        %1010 = vmatpush1.msra.mxu0 0.0
        %1011 = vmatprep.subr.mxu0 0.0
        %1012 = vmatpush1.msra.mxu0 0.0
        %1013 = vmatprep.subr.mxu0 0.0
        %1014 = vmatpush1.msra.mxu0 0.0
        %1015 = vmatprep.subr.mxu0 0.0
        %1016 = vmatpush1.msra.mxu0 0.0
        %1017 = vmatprep.subr.mxu0 0.0
        %1018 = vmatpush1.msra.mxu0 0.0
        %1019 = vmatprep.subr.mxu0 0.0
        %1020 = vmatpush1.msra.mxu0 0.0
        %1021 = vmatprep.subr.mxu0 0.0
        %1022 = vmatpush1.msra.mxu0 0.0
        %1023 = vmatprep.subr.mxu0 0.0
        %1024 = vmatpush1.msra.mxu0 0.0
        %1025 = vmatprep.mubr.f32.mxu0 0.0
        %1026 = vmatmul.mubr.f32.gmra.mrb[0].mxu0 %v959
        %v1027 = vpop.f32.mrb[0].mxu0
        %v1028 = vadd.f32 0.0, %v1027
        %v1029 = vpop.f32.mrb[0].mxu0
        %1030 = vdwg.mxu0
        %v1031 = vmul.f32 %v456, %v456
        %v1032 = vmul.f32 %v599, %v599
        %v1033 = vmul.f32 %v456, %v599
        %v1034 = vsub.f32 %v742, %v1031
        %v1035 = vsub.f32 %v885, %v1032
        %v1036 = vsub.f32 %v1028, %v1033
        %v1037 = vmul.f32 %v1036, 2.0
        %v1038 = vstv %s298
        %v1039 = vadd.f32 %v1037, %v1038
        %v1040 = vadd.f32 %v1034, %v1035
        %v1041 = vadd.f32 %v1040, %v1038
        %v1042 = vmul.f32 %v1033, 2.0
        %v1043 = vstv %s297
        %v1044 = vadd.f32 %v1042, %v1043
        %v1045 = vmul.f32 %v1044, %v1039
        %v1046 = vadd.f32 %v1031, %v1032
        %v1047 = vadd.f32 %v1046, %v1043
        %v1048 = vmul.f32 %v1047, %v1041
        %v1049 = vrcp.pop %v1048
        %v1050 = vmul.f32 %v1048, %v1049
        %v1051 = vsub.f32 2.0, %v1050
        %v1052 = vmul.f32 %v1049, %v1051
        %v1053 = vmul.f32 %v1045, %v1052
        %vm1054 = vcmask 46080
        %v1055 = vsel %vm1054, %v1053, 0.0
        %1056 = vadd.xlane.f32.xlu0 %v1055
        %v1057 = vpop.xlane.xlu0 %1056
        %v1058 = vrot.slane %v1057, 4
        %v1059 = vadd.f32 %v1057, %v1058
        %v1060 = vrot.slane %v1059, 2
        %v1061 = vadd.f32 %v1059, %v1060
        %v1062 = vrot.slane %v1061, 1
        %v1063 = vadd.f32 %v1061, %v1062
        %s1064 = vtos %v1063
        %v1065 = vlaneseq
        %v1066 = vshrl.u32 %v1065, 7
        %v1067 = vlaneseq
        %v1068 = vand.u32 %v1067, 127
        %vm1069 = vcmp.eq.s32.totalorder %v1066, 0
        %vm1070 = vcmp.eq.s32.totalorder %v1068, 0
        %vm1071 = vmand %vm1069, %vm1070
        %v1072 = vstv %s1064
        %v1073 = vsel %vm1071, %v1072, 0.0
        %1074 = vst [vmem:[%s296] sm:$0xff] %v1073
        %s1075 = sand.u32 %s149, 1
        %s1076 = scalar_lea.sflag [#allocation4], %s1075
        %s1077 = sand.u32 %s149, 1
        %s1078 = smul.addr %s1077, 8
        %s1079 = scalar_lea.vmem [#allocation9], %s1078
        // Predicated region
        $region53: #{tpu_custom_call.1} parent=39 // pred_check
          %p1080 = pneg %p159
        $region54: #{tpu_custom_call.1} parent=39 // pred_check_branch
          %1082 = sbr.rel (%p1080) target = $region56
        $region55: #{tpu_custom_call.1} parent=39 // pred_region
          %s1084 = ssub.s32 128, 128
          %1085 = vsyncadd %s1076, %s1084
          %s1086 = smul.addr %s26, 128
          %s1087 = scalar_lea.hbm %s5, %s1086
          %s1089 = sshll.u32 %s1079, 4
          %s1090 = int_to_ptr.vmem [resolvable:$true] %s1089
          %1092 = dma.vmem_to_hbm [thread:$0]  %s1090, 128, %s1087, %s1076
        $region56: #{tpu_custom_call.1} parent=39 // pred_fallthru
          _
      $region40: #{tpu_custom_call.1} parent=5 // pred_fallthru
        _
      %p1093 = scmp.le.s32.totalorder 2, %s21
      // Predicated region
      $region57: #{tpu_custom_call.1} parent=5 // pred_check
        %p1094 = pneg %p1093
      $region58: #{tpu_custom_call.1} parent=5 // pred_check_branch
        %1096 = sbr.rel (%p1094) target = $region60
      $region59: #{tpu_custom_call.1} parent=5 // pred_region
        %s1097 = ssub.s32 %s21, 2
        // Predicated region
        $region61: #{tpu_custom_call.1} parent=59 // pred_check
          %p1098 = pneg %p165
        $region62: #{tpu_custom_call.1} parent=59 // pred_check_branch
          %1100 = sbr.rel (%p1098) target = $region64
        $region63: #{tpu_custom_call.1} parent=59 // pred_region
          %s1101 = sand.u32 %s150, 1
          %s1102 = scalar_lea.sflag [#allocation4], %s1101
          %s1103 = sand.u32 %s150, 1
          %s1104 = smul.addr %s1103, 8
          %s1105 = scalar_lea.vmem [#allocation9], %s1104
          %1106 = dma.done %s1102, 128
        $region64: #{tpu_custom_call.1} parent=59 // pred_fallthru
          _
      $region60: #{tpu_custom_call.1} parent=5 // pred_fallthru
        _
    $region6: #{tpu_custom_call.1} parent=1 // loop_footer
      %s25 = sadd.s32 1, %s21
    $region7: #{tpu_custom_call.1} parent=1 // loop_footer_branch
      %20 = sbr.rel target = $region3
    $region8: #{tpu_custom_call.1} parent=1 // loop_exit
      _
    %1107 = vsyncpa [#allocation3], 1
    %s1108 = scalar_lea.sflag [#allocation3], 1
    %1109 = vsyncpa %s1108, 1
    %1110 = vsyncpa [#allocation8], 1
    %s1111 = scalar_lea.sflag [#allocation8], 1
    %1112 = vsyncpa %s1111, 1
    %1113 = vsyncpa [#allocation4], 1
    %s1114 = scalar_lea.sflag [#allocation4], 1
    %1115 = vsyncpa %s1114, 1
    %1116 = vsyncpa [#allocation5], 1
    %s1117 = scalar_lea.sflag [#allocation5], 1
    %1118 = vsyncpa %s1117, 1

</llo_original>
